<compile_context>
chip_gen: v7x
topology: tpu7x:2x2x1
jax: 0.10.0
libtpu: 0.0.40
codegen_flags: <defaults>
</compile_context>

<pallas_src>
import numpy as np
import jax
import jax.numpy as jnp
from jax.experimental import pallas as pl
from jax.experimental.pallas import tpu as pltpu


def _round_up(n: int, m: int) -> int:
    return ((n + m - 1) // m) * m


def _adaptive_pool_matrix_1d(in_size: int, out_size: int) -> np.ndarray:
    """Exact adaptive-avg-pool weights along one dim (same bin rule as PyTorch)."""
    P = np.zeros((in_size, out_size), dtype=np.float32)
    for i in range(out_size):
        start = (i * in_size) // out_size
        end = ((i + 1) * in_size + out_size - 1) // out_size  # ceil
        P[start:end, i] = 1.0 / float(end - start)
    return P


def _regressor_kernel(x_ref, p_ref, w_ref, b_ref, o_ref):
    # x_ref: (C, B_pad, K_pad)   channel-major flattened input
    # p_ref: (K_pad, 128)        shared adaptive-pool operator (125 cols used)
    # w_ref: (C, 128, O_pad)     fc weight, per-channel slab (125 rows used)
    # b_ref: (1, O_pad)          fc bias
    # o_ref: (B_pad, O_pad)
    C, Bp, Kp = x_ref.shape
    Pp = p_ref.shape[1]
    Op = w_ref.shape[2]

    # One pooling matmul for all channels at once (leading-dim merge is
    # layout-preserving: Bp == 8 == one sublane tile).
    x_flat = x_ref[...].reshape(C * Bp, Kp)
    pooled = jnp.dot(x_flat, p_ref[...], preferred_element_type=jnp.float32)
    pooled = pooled.reshape(C, Bp, Pp)

    # FC: accumulate the per-channel contributions (C is tiny -> static unroll;
    # each slice pooled[c] is a contiguous (8, 128) tile).
    acc = jnp.zeros((Bp, Op), jnp.float32)
    for c in range(C):
        acc = acc + jnp.dot(pooled[c], w_ref[c],
                            preferred_element_type=jnp.float32)

    # sigmoid(y) * 2 - 1  ==  tanh(y / 2)   (single EUP op)
    o_ref[...] = jnp.tanh(0.5 * (acc + b_ref[...]))


def linear_regressor_3d_forward(x, weight, bias):
    """x: (B, C, D, H, W) f32; weight: (out_dim, C*125); bias: (out_dim,)."""
    B, C, D, H, W = x.shape
    out_dim = weight.shape[0]
    K = D * H * W

    # Exact adaptive-pool linear operator, shared across channels (static glue).
    Pd = _adaptive_pool_matrix_1d(D, 5)
    Ph = _adaptive_pool_matrix_1d(H, 5)
    Pw = _adaptive_pool_matrix_1d(W, 5)
    P3 = np.einsum("di,hj,wk->dhwijk", Pd, Ph, Pw).reshape(K, 125)

    # Lane/sublane-dense padded sizes.
    K_pad = _round_up(K, 128)
    P_pad = _round_up(125, 128)        # 128
    O_pad = _round_up(out_dim, 128)
    B_pad = _round_up(B, 8)

    p_np = np.zeros((K_pad, P_pad), dtype=np.float32)
    p_np[:K, :125] = P3
    p_mat = jnp.asarray(p_np)

    # Input: (B, C, D, H, W) -> (C, B_pad, K_pad), channel-major so pooled[c]
    # and x[c] are contiguous (8, k) tiles inside the kernel.
    x3 = jnp.transpose(jnp.asarray(x, jnp.float32).reshape(B, C, K), (1, 0, 2))
    x3 = jnp.pad(x3, ((0, 0), (0, B_pad - B), (0, K_pad - K)))

    # FC weight (out_dim, C*125) -> (C, 125, out_dim), padded to (C, 128, O_pad).
    w_r = jnp.transpose(jnp.asarray(weight, jnp.float32).reshape(out_dim, C, 125),
                        (1, 2, 0))
    w_r = jnp.pad(w_r, ((0, 0), (0, P_pad - 125), (0, O_pad - out_dim)))

    b_p = jnp.pad(jnp.asarray(bias, jnp.float32).reshape(1, out_dim),
                  ((0, 0), (0, O_pad - out_dim)))

    y = pl.pallas_call(
        _regressor_kernel,
        out_shape=jax.ShapeDtypeStruct((B_pad, O_pad), jnp.float32),
        in_specs=[
            pl.BlockSpec(x3.shape, lambda: (0, 0, 0)),
            pl.BlockSpec(p_mat.shape, lambda: (0, 0)),
            pl.BlockSpec(w_r.shape, lambda: (0, 0, 0)),
            pl.BlockSpec(b_p.shape, lambda: (0, 0)),
        ],
        out_specs=pl.BlockSpec((B_pad, O_pad), lambda: (0, 0)),
        # Footprint is well under 2 MiB; 16 MiB is safe headroom on v5e/v6e/v7x.
        compiler_params=pltpu.CompilerParams(vmem_limit_bytes=16 * 1024 * 1024),
    )(x3, p_mat, w_r, b_p)

    y = y[:B, :out_dim]
    # Faithful to the module: view(-1, num_keypoints, 3).  Like torch, this
    # requires (B*out_dim) % (out_dim*3) == 0 and mixes coordinates across rows.
    return y.reshape(-1, out_dim, 3)


def _reference_forward(x, weight, bias):
    """Pure-JAX reference mirroring the PyTorch module."""
    B, C, D, H, W = x.shape
    out_dim = weight.shape[0]
    Pd = jnp.asarray(_adaptive_pool_matrix_1d(D, 5))
    Ph = jnp.asarray(_adaptive_pool_matrix_1d(H, 5))
    Pw = jnp.asarray(_adaptive_pool_matrix_1d(W, 5))
    pooled = jnp.einsum("bcdhw,di,hj,wk->bcijk", x, Pd, Ph, Pw).reshape(B, -1)
    y = pooled @ weight.T + bias
    y = jax.nn.sigmoid(y) * 2.0 - 1.0
    return y.reshape(-1, out_dim, 3)


if __name__ == "__main__":
    # Shapes consistent with the module: in_dim (channels) = 4, spatial = 10^3,
    # out_dim (num_keypoints) = 27, batch = 6 so view(-1, out_dim, 3) is valid.
    B, C, D, H, W = 6, 4, 10, 10, 10
    out_dim = 27
    in_features = C * 5 ** 3

    key = jax.random.PRNGKey(0)
    kx, kw, kb = jax.random.split(key, 3)
    x = jax.random.normal(kx, (B, C, D, H, W), dtype=jnp.float32)
    bound = 1.0 / np.sqrt(in_features)  # PyTorch nn.Linear default init range
    weight = jax.random.uniform(kw, (out_dim, in_features), jnp.float32, -bound, bound)
    bias = jax.random.uniform(kb, (out_dim,), jnp.float32, -bound, bound)

    out = linear_regressor_3d_forward(x, weight, bias)
    out = jax.block_until_ready(out)

    ref = _reference_forward(x, weight, bias)
    assert out.shape == (B // 3 * (out_dim // out_dim), out_dim, 3) or out.shape == (2, out_dim, 3), out.shape
    # Default (non-HIGHEST) MXU precision -> bf16-pass-class accuracy; tolerance
    # sized accordingly while still catching any real semantic error.
    np.testing.assert_allclose(np.asarray(out), np.asarray(ref), rtol=5e-3, atol=5e-3)

    print("KERNEL_OK")
</pallas_src>

<mosaic_0001>
module attributes {stable_mosaic.version = 11 : i64} {
  func.func @_regressor_kernel(%arg0: memref<4x8x1024xf32, #tpu.memory_space<vmem>>, %arg1: memref<1024x128xf32, #tpu.memory_space<vmem>>, %arg2: memref<4x128x128xf32, #tpu.memory_space<vmem>>, %arg3: memref<1x128xf32, #tpu.memory_space<vmem>>, %arg4: memref<8x128xf32, #tpu.memory_space<vmem>>) attributes {dimension_semantics = [], scalar_prefetch = 0 : i64, scratch_operands = 0 : i64, tpu.core_type = #tpu.core_type<tc>} {
    %c0 = arith.constant 0 : index
    %c0_0 = arith.constant 0 : index
    %c0_1 = arith.constant 0 : index
    %0 = vector.load %arg0[%c0, %c0_0, %c0_1] : memref<4x8x1024xf32, #tpu.memory_space<vmem>>, vector<4x8x1024xf32>
    %1 = vector.shape_cast %0 : vector<4x8x1024xf32> to vector<32x1024xf32>
    %c0_2 = arith.constant 0 : index
    %c0_3 = arith.constant 0 : index
    %2 = vector.load %arg1[%c0_2, %c0_3] : memref<1024x128xf32, #tpu.memory_space<vmem>>, vector<1024x128xf32>
    %cst = arith.constant dense<0.000000e+00> : vector<32x128xf32>
    %3 = tpu.matmul %1, %2, %cst {dimension_numbers = #tpu.dot_dimension_numbers<[1], [0], [0], [1], [0, 0, 1, 1], [], []>} : vector<32x1024xf32>, vector<1024x128xf32>, vector<32x128xf32> -> vector<32x128xf32>
    %4 = vector.shape_cast %3 : vector<32x128xf32> to vector<4x8x128xf32>
    %cst_4 = arith.constant 0.000000e+00 : f32
    %5 = vector.broadcast %cst_4 : f32 to vector<8x128xf32>
    %6 = vector.extract_strided_slice %4 {offsets = [0, 0, 0], sizes = [1, 8, 128], strides = [1, 1, 1]} : vector<4x8x128xf32> to vector<1x8x128xf32>
    %7 = vector.shape_cast %6 : vector<1x8x128xf32> to vector<8x128xf32>
    %c0_5 = arith.constant 0 : index
    %c0_6 = arith.constant 0 : index
    %c0_7 = arith.constant 0 : index
    %8 = vector.load %arg2[%c0_5, %c0_6, %c0_7] : memref<4x128x128xf32, #tpu.memory_space<vmem>>, vector<1x128x128xf32>
    %9 = vector.shape_cast %8 : vector<1x128x128xf32> to vector<128x128xf32>
    %cst_8 = arith.constant dense<0.000000e+00> : vector<8x128xf32>
    %10 = tpu.matmul %7, %9, %cst_8 {dimension_numbers = #tpu.dot_dimension_numbers<[1], [0], [0], [1], [0, 0, 1, 1], [], []>} : vector<8x128xf32>, vector<128x128xf32>, vector<8x128xf32> -> vector<8x128xf32>
    %11 = arith.addf %5, %10 : vector<8x128xf32>
    %12 = vector.extract_strided_slice %4 {offsets = [1, 0, 0], sizes = [1, 8, 128], strides = [1, 1, 1]} : vector<4x8x128xf32> to vector<1x8x128xf32>
    %13 = vector.shape_cast %12 : vector<1x8x128xf32> to vector<8x128xf32>
    %c1 = arith.constant 1 : index
    %c0_9 = arith.constant 0 : index
    %c0_10 = arith.constant 0 : index
    %14 = vector.load %arg2[%c1, %c0_9, %c0_10] : memref<4x128x128xf32, #tpu.memory_space<vmem>>, vector<1x128x128xf32>
    %15 = vector.shape_cast %14 : vector<1x128x128xf32> to vector<128x128xf32>
    %cst_11 = arith.constant dense<0.000000e+00> : vector<8x128xf32>
    %16 = tpu.matmul %13, %15, %cst_11 {dimension_numbers = #tpu.dot_dimension_numbers<[1], [0], [0], [1], [0, 0, 1, 1], [], []>} : vector<8x128xf32>, vector<128x128xf32>, vector<8x128xf32> -> vector<8x128xf32>
    %17 = arith.addf %11, %16 : vector<8x128xf32>
    %18 = vector.extract_strided_slice %4 {offsets = [2, 0, 0], sizes = [1, 8, 128], strides = [1, 1, 1]} : vector<4x8x128xf32> to vector<1x8x128xf32>
    %19 = vector.shape_cast %18 : vector<1x8x128xf32> to vector<8x128xf32>
    %c2 = arith.constant 2 : index
    %c0_12 = arith.constant 0 : index
    %c0_13 = arith.constant 0 : index
    %20 = vector.load %arg2[%c2, %c0_12, %c0_13] : memref<4x128x128xf32, #tpu.memory_space<vmem>>, vector<1x128x128xf32>
    %21 = vector.shape_cast %20 : vector<1x128x128xf32> to vector<128x128xf32>
    %cst_14 = arith.constant dense<0.000000e+00> : vector<8x128xf32>
    %22 = tpu.matmul %19, %21, %cst_14 {dimension_numbers = #tpu.dot_dimension_numbers<[1], [0], [0], [1], [0, 0, 1, 1], [], []>} : vector<8x128xf32>, vector<128x128xf32>, vector<8x128xf32> -> vector<8x128xf32>
    %23 = arith.addf %17, %22 : vector<8x128xf32>
    %24 = vector.extract_strided_slice %4 {offsets = [3, 0, 0], sizes = [1, 8, 128], strides = [1, 1, 1]} : vector<4x8x128xf32> to vector<1x8x128xf32>
    %25 = vector.shape_cast %24 : vector<1x8x128xf32> to vector<8x128xf32>
    %c3 = arith.constant 3 : index
    %c0_15 = arith.constant 0 : index
    %c0_16 = arith.constant 0 : index
    %26 = vector.load %arg2[%c3, %c0_15, %c0_16] : memref<4x128x128xf32, #tpu.memory_space<vmem>>, vector<1x128x128xf32>
    %27 = vector.shape_cast %26 : vector<1x128x128xf32> to vector<128x128xf32>
    %cst_17 = arith.constant dense<0.000000e+00> : vector<8x128xf32>
    %28 = tpu.matmul %25, %27, %cst_17 {dimension_numbers = #tpu.dot_dimension_numbers<[1], [0], [0], [1], [0, 0, 1, 1], [], []>} : vector<8x128xf32>, vector<128x128xf32>, vector<8x128xf32> -> vector<8x128xf32>
    %29 = arith.addf %23, %28 : vector<8x128xf32>
    %c0_18 = arith.constant 0 : index
    %c0_19 = arith.constant 0 : index
    %30 = vector.load %arg3[%c0_18, %c0_19] : memref<1x128xf32, #tpu.memory_space<vmem>>, vector<1x128xf32>
    %31 = vector.broadcast %30 : vector<1x128xf32> to vector<8x128xf32>
    %32 = arith.addf %29, %31 : vector<8x128xf32>
    %cst_20 = arith.constant 5.000000e-01 : f32
    %33 = vector.broadcast %cst_20 : f32 to vector<8x128xf32>
    %34 = arith.mulf %33, %32 : vector<8x128xf32>
    %35 = math.tanh %34 : vector<8x128xf32>
    %c0_21 = arith.constant 0 : index
    %c0_22 = arith.constant 0 : index
    %36 = vector.load %arg4[%c0_21, %c0_22] : memref<8x128xf32, #tpu.memory_space<vmem>>, vector<8x128xf32>
    tpu.vector_store %arg4[%c0_21, %c0_22], %35 {strides = array<i32>} : memref<8x128xf32, #tpu.memory_space<vmem>>, vector<8x128xf32>,
    return
  }
}

</mosaic_0001>

<llo_original>
// kernel: tpu_custom_call.1
$region0: #{tpu_custom_call.1}
  #allocation0 [shape = 'u32[]', space=smem, size = 0x4, offset = 0x4, fixed_abs, tag = 'smem constant byte address 0x4 - core index']
  #allocation1 [shape = 'u32[144,128]{1,0:T(1,128)}', space=vmem, size = 0x12000, scoped, tag = 'internal scratch']
  %s0 = inlined_call_operand.hbm [shape: f32[4,8,1024], index: 0, kind: input, shape index: {}]
  %s1 = inlined_call_operand.hbm [shape: f32[1024,128], index: 1, kind: input, shape index: {}]
  %s2 = inlined_call_operand.hbm [shape: f32[4,128,128], index: 2, kind: input, shape index: {}]
  %s3 = inlined_call_operand.vmem [shape: f32[1,128], index: 3, kind: input, shape index: {}]
  %s4 = inlined_call_operand.hbm [shape: f32[8,128], index: 4, kind: output, shape index: {}]
  %s5 = sld [smem:[#allocation0]]
  $region38: #{tpu_custom_call.1} parent=0
    _
  %s7 = ssub.s32 1, %s5
  %s8 = scalar_select 0, %s7, %s5
  $region1: #{tpu_custom_call.1} parent=0
    #allocation2 [shape = 'u8[131072]{0}', space=vmem, size = 0x20000, scoped, tag = 'input window, operand 0, single buffered']
    #allocation3 [shape = 's32[1]{0}', space=sflag, size = 0x4, scoped, tag = 'scoped memory for tpu_custom_call.1']
    #allocation4 [shape = 's32[1]{0}', space=sflag, size = 0x4, scoped, tag = 'scoped memory for tpu_custom_call.1']
    #allocation5 [shape = 'u8[524288]{0}', space=vmem, size = 0x80000, scoped, tag = 'input window, operand 1, single buffered']
    #allocation6 [shape = 's32[1]{0}', space=sflag, size = 0x4, scoped, tag = 'scoped memory for tpu_custom_call.1']
    #allocation7 [shape = 'u8[262144]{0}', space=vmem, size = 0x40000, scoped, tag = 'input window, operand 2, single buffered']
    #allocation8 [shape = 'u8[4096]{0}', space=vmem, size = 0x1000, scoped, tag = 'output window, operand 0, single buffered']
    %9 = vsyncpa [#allocation3], 0
    %10 = vsyncpa [#allocation6], 0
    %11 = vsyncpa [#allocation4], 0
    // Predicated region
    $region2: #{tpu_custom_call.1} parent=1 // pred_check
      _
    $region3: #{tpu_custom_call.1} parent=1 // pred_check_branch
      %13 = sbr.rel (0) target = $region5
    $region4: #{tpu_custom_call.1} parent=1 // pred_region
      %s15 = ssub.s32 4096, 4096
      %16 = vsyncadd [#allocation3], %s15
      %s17 = sshll.u32 [#allocation2], 4
      %s18 = int_to_ptr.vmem [resolvable:$true] %s17
      %23 = dma.hbm_to_vmem [thread:$0]  %s0, 4096, %s18, [#allocation3], 1024, 1024, 64
    $region5: #{tpu_custom_call.1} parent=1 // pred_fallthru
      _
    // Predicated region
    $region6: #{tpu_custom_call.1} parent=1 // pred_check
      _
    $region7: #{tpu_custom_call.1} parent=1 // pred_check_branch
      %25 = sbr.rel (0) target = $region9
    $region8: #{tpu_custom_call.1} parent=1 // pred_region
      %s27 = ssub.s32 16384, 16384
      %28 = vsyncadd [#allocation6], %s27
      %s29 = sshll.u32 [#allocation5], 4
      %s30 = int_to_ptr.vmem [resolvable:$true] %s29
      %35 = dma.hbm_to_vmem [thread:$0]  %s1, 16384, %s30, [#allocation6], 128, 128, 8
    $region9: #{tpu_custom_call.1} parent=1 // pred_fallthru
      _
    // Predicated region
    $region10: #{tpu_custom_call.1} parent=1 // pred_check
      _
    $region11: #{tpu_custom_call.1} parent=1 // pred_check_branch
      %37 = sbr.rel (0) target = $region13
    $region12: #{tpu_custom_call.1} parent=1 // pred_region
      %s39 = ssub.s32 8192, 8192
      %40 = vsyncadd [#allocation6], %s39
      %s41 = sshll.u32 [#allocation7], 4
      %s42 = int_to_ptr.vmem [resolvable:$true] %s41
      %47 = dma.hbm_to_vmem [thread:$0]  %s2, 8192, %s42, [#allocation6], 128, 128, 8
    $region13: #{tpu_custom_call.1} parent=1 // pred_fallthru
      _
    // Predicated region
    $region14: #{tpu_custom_call.1} parent=1 // pred_check
      _
    $region15: #{tpu_custom_call.1} parent=1 // pred_check_branch
      %49 = sbr.rel (0) target = $region17
    $region16: #{tpu_custom_call.1} parent=1 // pred_region
      _
    $region17: #{tpu_custom_call.1} parent=1 // pred_fallthru
      _
    // Predicated region
    $region18: #{tpu_custom_call.1} parent=1 // pred_check
      _
    $region19: #{tpu_custom_call.1} parent=1 // pred_check_branch
      %51 = sbr.rel (0) target = $region21
    $region20: #{tpu_custom_call.1} parent=1 // pred_region
      %52 = dma.done [#allocation3], 4096
    $region21: #{tpu_custom_call.1} parent=1 // pred_fallthru
      _
    // Predicated region
    $region22: #{tpu_custom_call.1} parent=1 // pred_check
      _
    $region23: #{tpu_custom_call.1} parent=1 // pred_check_branch
      %54 = sbr.rel (0) target = $region25
    $region24: #{tpu_custom_call.1} parent=1 // pred_region
      %55 = dma.done [#allocation6], 16384
    $region25: #{tpu_custom_call.1} parent=1 // pred_fallthru
      _
    // Predicated region
    $region26: #{tpu_custom_call.1} parent=1 // pred_check
      _
    $region27: #{tpu_custom_call.1} parent=1 // pred_check_branch
      %57 = sbr.rel (0) target = $region29
    $region28: #{tpu_custom_call.1} parent=1 // pred_region
      %58 = dma.done [#allocation6], 8192
    $region29: #{tpu_custom_call.1} parent=1 // pred_fallthru
      _
    %v59 = vld [vmem:[#allocation2] sm:$0xff]
    %v60 = vld [vmem:[#allocation2 + $0x8] sm:$0xff]
    %v61 = vld [vmem:[#allocation2 + $0x10] sm:$0xff]
    %v62 = vld [vmem:[#allocation2 + $0x18] sm:$0xff]
    %v63 = vld [vmem:[#allocation2 + $0x20] sm:$0xff]
    %v64 = vld [vmem:[#allocation2 + $0x28] sm:$0xff]
    %v65 = vld [vmem:[#allocation2 + $0x30] sm:$0xff]
    %v66 = vld [vmem:[#allocation2 + $0x38] sm:$0xff]
    %v67 = vld [vmem:[#allocation2 + $0x40] sm:$0xff]
    %v68 = vld [vmem:[#allocation2 + $0x48] sm:$0xff]
    %v69 = vld [vmem:[#allocation2 + $0x50] sm:$0xff]
    %v70 = vld [vmem:[#allocation2 + $0x58] sm:$0xff]
    %v71 = vld [vmem:[#allocation2 + $0x60] sm:$0xff]
    %v72 = vld [vmem:[#allocation2 + $0x68] sm:$0xff]
    %v73 = vld [vmem:[#allocation2 + $0x70] sm:$0xff]
    %v74 = vld [vmem:[#allocation2 + $0x78] sm:$0xff]
    %v75 = vld [vmem:[#allocation2 + $0x80] sm:$0xff]
    %v76 = vld [vmem:[#allocation2 + $0x88] sm:$0xff]
    %v77 = vld [vmem:[#allocation2 + $0x90] sm:$0xff]
    %v78 = vld [vmem:[#allocation2 + $0x98] sm:$0xff]
    %v79 = vld [vmem:[#allocation2 + $0xa0] sm:$0xff]
    %v80 = vld [vmem:[#allocation2 + $0xa8] sm:$0xff]
    %v81 = vld [vmem:[#allocation2 + $0xb0] sm:$0xff]
    %v82 = vld [vmem:[#allocation2 + $0xb8] sm:$0xff]
    %v83 = vld [vmem:[#allocation2 + $0xc0] sm:$0xff]
    %v84 = vld [vmem:[#allocation2 + $0xc8] sm:$0xff]
    %v85 = vld [vmem:[#allocation2 + $0xd0] sm:$0xff]
    %v86 = vld [vmem:[#allocation2 + $0xd8] sm:$0xff]
    %v87 = vld [vmem:[#allocation2 + $0xe0] sm:$0xff]
    %v88 = vld [vmem:[#allocation2 + $0xe8] sm:$0xff]
    %v89 = vld [vmem:[#allocation2 + $0xf0] sm:$0xff]
    %v90 = vld [vmem:[#allocation2 + $0xf8] sm:$0xff]
    %v91 = vld [vmem:[#allocation5] sm:$0xff]
    %v92 = vld [vmem:[#allocation5 + $0x8] sm:$0xff]
    %v93 = vld [vmem:[#allocation5 + $0x10] sm:$0xff]
    %v94 = vld [vmem:[#allocation5 + $0x18] sm:$0xff]
    %v95 = vld [vmem:[#allocation5 + $0x20] sm:$0xff]
    %v96 = vld [vmem:[#allocation5 + $0x28] sm:$0xff]
    %v97 = vld [vmem:[#allocation5 + $0x30] sm:$0xff]
    %v98 = vld [vmem:[#allocation5 + $0x38] sm:$0xff]
    %v99 = vld [vmem:[#allocation5 + $0x40] sm:$0xff]
    %v100 = vld [vmem:[#allocation5 + $0x48] sm:$0xff]
    %v101 = vld [vmem:[#allocation5 + $0x50] sm:$0xff]
    %v102 = vld [vmem:[#allocation5 + $0x58] sm:$0xff]
    %v103 = vld [vmem:[#allocation5 + $0x60] sm:$0xff]
    %v104 = vld [vmem:[#allocation5 + $0x68] sm:$0xff]
    %v105 = vld [vmem:[#allocation5 + $0x70] sm:$0xff]
    %v106 = vld [vmem:[#allocation5 + $0x78] sm:$0xff]
    %v107 = vld [vmem:[#allocation5 + $0x80] sm:$0xff]
    %v108 = vld [vmem:[#allocation5 + $0x88] sm:$0xff]
    %v109 = vld [vmem:[#allocation5 + $0x90] sm:$0xff]
    %v110 = vld [vmem:[#allocation5 + $0x98] sm:$0xff]
    %v111 = vld [vmem:[#allocation5 + $0xa0] sm:$0xff]
    %v112 = vld [vmem:[#allocation5 + $0xa8] sm:$0xff]
    %v113 = vld [vmem:[#allocation5 + $0xb0] sm:$0xff]
    %v114 = vld [vmem:[#allocation5 + $0xb8] sm:$0xff]
    %v115 = vld [vmem:[#allocation5 + $0xc0] sm:$0xff]
    %v116 = vld [vmem:[#allocation5 + $0xc8] sm:$0xff]
    %v117 = vld [vmem:[#allocation5 + $0xd0] sm:$0xff]
    %v118 = vld [vmem:[#allocation5 + $0xd8] sm:$0xff]
    %v119 = vld [vmem:[#allocation5 + $0xe0] sm:$0xff]
    %v120 = vld [vmem:[#allocation5 + $0xe8] sm:$0xff]
    %v121 = vld [vmem:[#allocation5 + $0xf0] sm:$0xff]
    %v122 = vld [vmem:[#allocation5 + $0xf8] sm:$0xff]
    %v123 = vld [vmem:[#allocation5 + $0x100] sm:$0xff]
    %v124 = vld [vmem:[#allocation5 + $0x108] sm:$0xff]
    %v125 = vld [vmem:[#allocation5 + $0x110] sm:$0xff]
    %v126 = vld [vmem:[#allocation5 + $0x118] sm:$0xff]
    %v127 = vld [vmem:[#allocation5 + $0x120] sm:$0xff]
    %v128 = vld [vmem:[#allocation5 + $0x128] sm:$0xff]
    %v129 = vld [vmem:[#allocation5 + $0x130] sm:$0xff]
    %v130 = vld [vmem:[#allocation5 + $0x138] sm:$0xff]
    %v131 = vld [vmem:[#allocation5 + $0x140] sm:$0xff]
    %v132 = vld [vmem:[#allocation5 + $0x148] sm:$0xff]
    %v133 = vld [vmem:[#allocation5 + $0x150] sm:$0xff]
    %v134 = vld [vmem:[#allocation5 + $0x158] sm:$0xff]
    %v135 = vld [vmem:[#allocation5 + $0x160] sm:$0xff]
    %v136 = vld [vmem:[#allocation5 + $0x168] sm:$0xff]
    %v137 = vld [vmem:[#allocation5 + $0x170] sm:$0xff]
    %v138 = vld [vmem:[#allocation5 + $0x178] sm:$0xff]
    %v139 = vld [vmem:[#allocation5 + $0x180] sm:$0xff]
    %v140 = vld [vmem:[#allocation5 + $0x188] sm:$0xff]
    %v141 = vld [vmem:[#allocation5 + $0x190] sm:$0xff]
    %v142 = vld [vmem:[#allocation5 + $0x198] sm:$0xff]
    %v143 = vld [vmem:[#allocation5 + $0x1a0] sm:$0xff]
    %v144 = vld [vmem:[#allocation5 + $0x1a8] sm:$0xff]
    %v145 = vld [vmem:[#allocation5 + $0x1b0] sm:$0xff]
    %v146 = vld [vmem:[#allocation5 + $0x1b8] sm:$0xff]
    %v147 = vld [vmem:[#allocation5 + $0x1c0] sm:$0xff]
    %v148 = vld [vmem:[#allocation5 + $0x1c8] sm:$0xff]
    %v149 = vld [vmem:[#allocation5 + $0x1d0] sm:$0xff]
    %v150 = vld [vmem:[#allocation5 + $0x1d8] sm:$0xff]
    %v151 = vld [vmem:[#allocation5 + $0x1e0] sm:$0xff]
    %v152 = vld [vmem:[#allocation5 + $0x1e8] sm:$0xff]
    %v153 = vld [vmem:[#allocation5 + $0x1f0] sm:$0xff]
    %v154 = vld [vmem:[#allocation5 + $0x1f8] sm:$0xff]
    %v155 = vld [vmem:[#allocation5 + $0x200] sm:$0xff]
    %v156 = vld [vmem:[#allocation5 + $0x208] sm:$0xff]
    %v157 = vld [vmem:[#allocation5 + $0x210] sm:$0xff]
    %v158 = vld [vmem:[#allocation5 + $0x218] sm:$0xff]
    %v159 = vld [vmem:[#allocation5 + $0x220] sm:$0xff]
    %v160 = vld [vmem:[#allocation5 + $0x228] sm:$0xff]
    %v161 = vld [vmem:[#allocation5 + $0x230] sm:$0xff]
    %v162 = vld [vmem:[#allocation5 + $0x238] sm:$0xff]
    %v163 = vld [vmem:[#allocation5 + $0x240] sm:$0xff]
    %v164 = vld [vmem:[#allocation5 + $0x248] sm:$0xff]
    %v165 = vld [vmem:[#allocation5 + $0x250] sm:$0xff]
    %v166 = vld [vmem:[#allocation5 + $0x258] sm:$0xff]
    %v167 = vld [vmem:[#allocation5 + $0x260] sm:$0xff]
    %v168 = vld [vmem:[#allocation5 + $0x268] sm:$0xff]
    %v169 = vld [vmem:[#allocation5 + $0x270] sm:$0xff]
    %v170 = vld [vmem:[#allocation5 + $0x278] sm:$0xff]
    %v171 = vld [vmem:[#allocation5 + $0x280] sm:$0xff]
    %v172 = vld [vmem:[#allocation5 + $0x288] sm:$0xff]
    %v173 = vld [vmem:[#allocation5 + $0x290] sm:$0xff]
    %v174 = vld [vmem:[#allocation5 + $0x298] sm:$0xff]
    %v175 = vld [vmem:[#allocation5 + $0x2a0] sm:$0xff]
    %v176 = vld [vmem:[#allocation5 + $0x2a8] sm:$0xff]
    %v177 = vld [vmem:[#allocation5 + $0x2b0] sm:$0xff]
    %v178 = vld [vmem:[#allocation5 + $0x2b8] sm:$0xff]
    %v179 = vld [vmem:[#allocation5 + $0x2c0] sm:$0xff]
    %v180 = vld [vmem:[#allocation5 + $0x2c8] sm:$0xff]
    %v181 = vld [vmem:[#allocation5 + $0x2d0] sm:$0xff]
    %v182 = vld [vmem:[#allocation5 + $0x2d8] sm:$0xff]
    %v183 = vld [vmem:[#allocation5 + $0x2e0] sm:$0xff]
    %v184 = vld [vmem:[#allocation5 + $0x2e8] sm:$0xff]
    %v185 = vld [vmem:[#allocation5 + $0x2f0] sm:$0xff]
    %v186 = vld [vmem:[#allocation5 + $0x2f8] sm:$0xff]
    %v187 = vld [vmem:[#allocation5 + $0x300] sm:$0xff]
    %v188 = vld [vmem:[#allocation5 + $0x308] sm:$0xff]
    %v189 = vld [vmem:[#allocation5 + $0x310] sm:$0xff]
    %v190 = vld [vmem:[#allocation5 + $0x318] sm:$0xff]
    %v191 = vld [vmem:[#allocation5 + $0x320] sm:$0xff]
    %v192 = vld [vmem:[#allocation5 + $0x328] sm:$0xff]
    %v193 = vld [vmem:[#allocation5 + $0x330] sm:$0xff]
    %v194 = vld [vmem:[#allocation5 + $0x338] sm:$0xff]
    %v195 = vld [vmem:[#allocation5 + $0x340] sm:$0xff]
    %v196 = vld [vmem:[#allocation5 + $0x348] sm:$0xff]
    %v197 = vld [vmem:[#allocation5 + $0x350] sm:$0xff]
    %v198 = vld [vmem:[#allocation5 + $0x358] sm:$0xff]
    %v199 = vld [vmem:[#allocation5 + $0x360] sm:$0xff]
    %v200 = vld [vmem:[#allocation5 + $0x368] sm:$0xff]
    %v201 = vld [vmem:[#allocation5 + $0x370] sm:$0xff]
    %v202 = vld [vmem:[#allocation5 + $0x378] sm:$0xff]
    %v203 = vld [vmem:[#allocation5 + $0x380] sm:$0xff]
    %v204 = vld [vmem:[#allocation5 + $0x388] sm:$0xff]
    %v205 = vld [vmem:[#allocation5 + $0x390] sm:$0xff]
    %v206 = vld [vmem:[#allocation5 + $0x398] sm:$0xff]
    %v207 = vld [vmem:[#allocation5 + $0x3a0] sm:$0xff]
    %v208 = vld [vmem:[#allocation5 + $0x3a8] sm:$0xff]
    %v209 = vld [vmem:[#allocation5 + $0x3b0] sm:$0xff]
    %v210 = vld [vmem:[#allocation5 + $0x3b8] sm:$0xff]
    %v211 = vld [vmem:[#allocation5 + $0x3c0] sm:$0xff]
    %v212 = vld [vmem:[#allocation5 + $0x3c8] sm:$0xff]
    %v213 = vld [vmem:[#allocation5 + $0x3d0] sm:$0xff]
    %v214 = vld [vmem:[#allocation5 + $0x3d8] sm:$0xff]
    %v215 = vld [vmem:[#allocation5 + $0x3e0] sm:$0xff]
    %v216 = vld [vmem:[#allocation5 + $0x3e8] sm:$0xff]
    %v217 = vld [vmem:[#allocation5 + $0x3f0] sm:$0xff]
    %v218 = vld [vmem:[#allocation5 + $0x3f8] sm:$0xff]
    %219 = vmatprep.subr.mxu0 0.0
    %220 = vmatpush1.msra.mxu0 %v91
    %221 = vmatprep.subr.mxu0 0.0
    %222 = vmatpush1.msra.mxu0 %v92
    %223 = vmatprep.subr.mxu0 0.0
    %224 = vmatpush1.msra.mxu0 %v93
    %225 = vmatprep.subr.mxu0 0.0
    %226 = vmatpush1.msra.mxu0 %v94
    %227 = vmatprep.subr.mxu0 0.0
    %228 = vmatpush1.msra.mxu0 %v95
    %229 = vmatprep.subr.mxu0 0.0
    %230 = vmatpush1.msra.mxu0 %v96
    %231 = vmatprep.subr.mxu0 0.0
    %232 = vmatpush1.msra.mxu0 %v97
    %233 = vmatprep.subr.mxu0 0.0
    %234 = vmatpush1.msra.mxu0 %v98
    %235 = vmatprep.subr.mxu0 0.0
    %236 = vmatpush1.msra.mxu0 %v99
    %237 = vmatprep.subr.mxu0 0.0
    %238 = vmatpush1.msra.mxu0 %v100
    %239 = vmatprep.subr.mxu0 0.0
    %240 = vmatpush1.msra.mxu0 %v101
    %241 = vmatprep.subr.mxu0 0.0
    %242 = vmatpush1.msra.mxu0 %v102
    %243 = vmatprep.subr.mxu0 0.0
    %244 = vmatpush1.msra.mxu0 %v103
    %245 = vmatprep.subr.mxu0 0.0
    %246 = vmatpush1.msra.mxu0 %v104
    %247 = vmatprep.subr.mxu0 0.0
    %248 = vmatpush1.msra.mxu0 %v105
    %249 = vmatprep.subr.mxu0 0.0
    %250 = vmatpush1.msra.mxu0 %v106
    %251 = vmatprep.subr.mxu0 0.0
    %252 = vmatpush1.msra.mxu0 %v107
    %253 = vmatprep.subr.mxu0 0.0
    %254 = vmatpush1.msra.mxu0 %v108
    %255 = vmatprep.subr.mxu0 0.0
    %256 = vmatpush1.msra.mxu0 %v109
    %257 = vmatprep.subr.mxu0 0.0
    %258 = vmatpush1.msra.mxu0 %v110
    %259 = vmatprep.subr.mxu0 0.0
    %260 = vmatpush1.msra.mxu0 %v111
    %261 = vmatprep.subr.mxu0 0.0
    %262 = vmatpush1.msra.mxu0 %v112
    %263 = vmatprep.subr.mxu0 0.0
    %264 = vmatpush1.msra.mxu0 %v113
    %265 = vmatprep.subr.mxu0 0.0
    %266 = vmatpush1.msra.mxu0 %v114
    %267 = vmatprep.subr.mxu0 0.0
    %268 = vmatpush1.msra.mxu0 %v115
    %269 = vmatprep.subr.mxu0 0.0
    %270 = vmatpush1.msra.mxu0 %v116
    %271 = vmatprep.subr.mxu0 0.0
    %272 = vmatpush1.msra.mxu0 %v117
    %273 = vmatprep.subr.mxu0 0.0
    %274 = vmatpush1.msra.mxu0 %v118
    %275 = vmatprep.subr.mxu0 0.0
    %276 = vmatpush1.msra.mxu0 %v119
    %277 = vmatprep.subr.mxu0 0.0
    %278 = vmatpush1.msra.mxu0 %v120
    %279 = vmatprep.subr.mxu0 0.0
    %280 = vmatpush1.msra.mxu0 %v121
    %281 = vmatprep.subr.mxu0 0.0
    %282 = vmatpush1.msra.mxu0 %v122
    %283 = vmatprep.mubr.f32.mxu0 %v60
    %284 = vmatmul.mubr.f32.gmra.mrb[0].mxu0 %v59
    %v285 = vpop.f32.mrb[0].mxu0
    %v286 = vadd.f32 0.0, %v285
    %v287 = vpop.f32.mrb[0].mxu0
    %288 = vmatprep.mubr.f32.mxu0 %v68
    %289 = vmatmul.mubr.f32.gmra.mrb[0].mxu0 %v67
    %v290 = vpop.f32.mrb[0].mxu0
    %v291 = vadd.f32 0.0, %v290
    %v292 = vpop.f32.mrb[0].mxu0
    %293 = vmatprep.mubr.f32.mxu0 %v76
    %294 = vmatmul.mubr.f32.gmra.mrb[0].mxu0 %v75
    %v295 = vpop.f32.mrb[0].mxu0
    %v296 = vadd.f32 0.0, %v295
    %v297 = vpop.f32.mrb[0].mxu0
    %298 = vmatprep.mubr.f32.mxu0 %v84
    %299 = vmatmul.mubr.f32.gmra.mrb[0].mxu0 %v83
    %v300 = vpop.f32.mrb[0].mxu0
    %v301 = vadd.f32 0.0, %v300
    %v302 = vpop.f32.mrb[0].mxu0
    %303 = vdwg.mxu0
    %304 = vmatprep.subr.mxu0 0.0
    %305 = vmatpush1.msra.mxu0 %v123
    %306 = vmatprep.subr.mxu0 0.0
    %307 = vmatpush1.msra.mxu0 %v124
    %308 = vmatprep.subr.mxu0 0.0
    %309 = vmatpush1.msra.mxu0 %v125
    %310 = vmatprep.subr.mxu0 0.0
    %311 = vmatpush1.msra.mxu0 %v126
    %312 = vmatprep.subr.mxu0 0.0
    %313 = vmatpush1.msra.mxu0 %v127
    %314 = vmatprep.subr.mxu0 0.0
    %315 = vmatpush1.msra.mxu0 %v128
    %316 = vmatprep.subr.mxu0 0.0
    %317 = vmatpush1.msra.mxu0 %v129
    %318 = vmatprep.subr.mxu0 0.0
    %319 = vmatpush1.msra.mxu0 %v130
    %320 = vmatprep.subr.mxu0 0.0
    %321 = vmatpush1.msra.mxu0 %v131
    %322 = vmatprep.subr.mxu0 0.0
    %323 = vmatpush1.msra.mxu0 %v132
    %324 = vmatprep.subr.mxu0 0.0
    %325 = vmatpush1.msra.mxu0 %v133
    %326 = vmatprep.subr.mxu0 0.0
    %327 = vmatpush1.msra.mxu0 %v134
    %328 = vmatprep.subr.mxu0 0.0
    %329 = vmatpush1.msra.mxu0 %v135
    %330 = vmatprep.subr.mxu0 0.0
    %331 = vmatpush1.msra.mxu0 %v136
    %332 = vmatprep.subr.mxu0 0.0
    %333 = vmatpush1.msra.mxu0 %v137
    %334 = vmatprep.subr.mxu0 0.0
    %335 = vmatpush1.msra.mxu0 %v138
    %336 = vmatprep.subr.mxu0 0.0
    %337 = vmatpush1.msra.mxu0 %v139
    %338 = vmatprep.subr.mxu0 0.0
    %339 = vmatpush1.msra.mxu0 %v140
    %340 = vmatprep.subr.mxu0 0.0
    %341 = vmatpush1.msra.mxu0 %v141
    %342 = vmatprep.subr.mxu0 0.0
    %343 = vmatpush1.msra.mxu0 %v142
    %344 = vmatprep.subr.mxu0 0.0
    %345 = vmatpush1.msra.mxu0 %v143
    %346 = vmatprep.subr.mxu0 0.0
    %347 = vmatpush1.msra.mxu0 %v144
    %348 = vmatprep.subr.mxu0 0.0
    %349 = vmatpush1.msra.mxu0 %v145
    %350 = vmatprep.subr.mxu0 0.0
    %351 = vmatpush1.msra.mxu0 %v146
    %352 = vmatprep.subr.mxu0 0.0
    %353 = vmatpush1.msra.mxu0 %v147
    %354 = vmatprep.subr.mxu0 0.0
    %355 = vmatpush1.msra.mxu0 %v148
    %356 = vmatprep.subr.mxu0 0.0
    %357 = vmatpush1.msra.mxu0 %v149
    %358 = vmatprep.subr.mxu0 0.0
    %359 = vmatpush1.msra.mxu0 %v150
    %360 = vmatprep.subr.mxu0 0.0
    %361 = vmatpush1.msra.mxu0 %v151
    %362 = vmatprep.subr.mxu0 0.0
    %363 = vmatpush1.msra.mxu0 %v152
    %364 = vmatprep.subr.mxu0 0.0
    %365 = vmatpush1.msra.mxu0 %v153
    %366 = vmatprep.subr.mxu0 0.0
    %367 = vmatpush1.msra.mxu0 %v154
    %368 = vmatprep.mubr.f32.mxu0 %v62
    %369 = vmatmul.mubr.f32.gmra.mrb[0].mxu0 %v61
    %v370 = vpop.f32.mrb[0].mxu0
    %v371 = vadd.f32 %v286, %v370
    %v372 = vpop.f32.mrb[0].mxu0
    %373 = vmatprep.mubr.f32.mxu0 %v70
    %374 = vmatmul.mubr.f32.gmra.mrb[0].mxu0 %v69
    %v375 = vpop.f32.mrb[0].mxu0
    %v376 = vadd.f32 %v291, %v375
    %v377 = vpop.f32.mrb[0].mxu0
    %378 = vmatprep.mubr.f32.mxu0 %v78
    %379 = vmatmul.mubr.f32.gmra.mrb[0].mxu0 %v77
    %v380 = vpop.f32.mrb[0].mxu0
    %v381 = vadd.f32 %v296, %v380
    %v382 = vpop.f32.mrb[0].mxu0
    %383 = vmatprep.mubr.f32.mxu0 %v86
    %384 = vmatmul.mubr.f32.gmra.mrb[0].mxu0 %v85
    %v385 = vpop.f32.mrb[0].mxu0
    %v386 = vadd.f32 %v301, %v385
    %v387 = vpop.f32.mrb[0].mxu0
    %388 = vdwg.mxu0
    %389 = vmatprep.subr.mxu0 0.0
    %390 = vmatpush1.msra.mxu0 %v155
    %391 = vmatprep.subr.mxu0 0.0
    %392 = vmatpush1.msra.mxu0 %v156
    %393 = vmatprep.subr.mxu0 0.0
    %394 = vmatpush1.msra.mxu0 %v157
    %395 = vmatprep.subr.mxu0 0.0
    %396 = vmatpush1.msra.mxu0 %v158
    %397 = vmatprep.subr.mxu0 0.0
    %398 = vmatpush1.msra.mxu0 %v159
    %399 = vmatprep.subr.mxu0 0.0
    %400 = vmatpush1.msra.mxu0 %v160
    %401 = vmatprep.subr.mxu0 0.0
    %402 = vmatpush1.msra.mxu0 %v161
    %403 = vmatprep.subr.mxu0 0.0
    %404 = vmatpush1.msra.mxu0 %v162
    %405 = vmatprep.subr.mxu0 0.0
    %406 = vmatpush1.msra.mxu0 %v163
    %407 = vmatprep.subr.mxu0 0.0
    %408 = vmatpush1.msra.mxu0 %v164
    %409 = vmatprep.subr.mxu0 0.0
    %410 = vmatpush1.msra.mxu0 %v165
    %411 = vmatprep.subr.mxu0 0.0
    %412 = vmatpush1.msra.mxu0 %v166
    %413 = vmatprep.subr.mxu0 0.0
    %414 = vmatpush1.msra.mxu0 %v167
    %415 = vmatprep.subr.mxu0 0.0
    %416 = vmatpush1.msra.mxu0 %v168
    %417 = vmatprep.subr.mxu0 0.0
    %418 = vmatpush1.msra.mxu0 %v169
    %419 = vmatprep.subr.mxu0 0.0
    %420 = vmatpush1.msra.mxu0 %v170
    %421 = vmatprep.subr.mxu0 0.0
    %422 = vmatpush1.msra.mxu0 %v171
    %423 = vmatprep.subr.mxu0 0.0
    %424 = vmatpush1.msra.mxu0 %v172
    %425 = vmatprep.subr.mxu0 0.0
    %426 = vmatpush1.msra.mxu0 %v173
    %427 = vmatprep.subr.mxu0 0.0
    %428 = vmatpush1.msra.mxu0 %v174
    %429 = vmatprep.subr.mxu0 0.0
    %430 = vmatpush1.msra.mxu0 %v175
    %431 = vmatprep.subr.mxu0 0.0
    %432 = vmatpush1.msra.mxu0 %v176
    %433 = vmatprep.subr.mxu0 0.0
    %434 = vmatpush1.msra.mxu0 %v177
    %435 = vmatprep.subr.mxu0 0.0
    %436 = vmatpush1.msra.mxu0 %v178
    %437 = vmatprep.subr.mxu0 0.0
    %438 = vmatpush1.msra.mxu0 %v179
    %439 = vmatprep.subr.mxu0 0.0
    %440 = vmatpush1.msra.mxu0 %v180
    %441 = vmatprep.subr.mxu0 0.0
    %442 = vmatpush1.msra.mxu0 %v181
    %443 = vmatprep.subr.mxu0 0.0
    %444 = vmatpush1.msra.mxu0 %v182
    %445 = vmatprep.subr.mxu0 0.0
    %446 = vmatpush1.msra.mxu0 %v183
    %447 = vmatprep.subr.mxu0 0.0
    %448 = vmatpush1.msra.mxu0 %v184
    %449 = vmatprep.subr.mxu0 0.0
    %450 = vmatpush1.msra.mxu0 %v185
    %451 = vmatprep.subr.mxu0 0.0
    %452 = vmatpush1.msra.mxu0 %v186
    %453 = vmatprep.mubr.f32.mxu0 %v64
    %454 = vmatmul.mubr.f32.gmra.mrb[0].mxu0 %v63
    %v455 = vpop.f32.mrb[0].mxu0
    %v456 = vadd.f32 %v371, %v455
    %v457 = vpop.f32.mrb[0].mxu0
    %458 = vmatprep.mubr.f32.mxu0 %v72
    %459 = vmatmul.mubr.f32.gmra.mrb[0].mxu0 %v71
    %v460 = vpop.f32.mrb[0].mxu0
    %v461 = vadd.f32 %v376, %v460
    %v462 = vpop.f32.mrb[0].mxu0
    %463 = vmatprep.mubr.f32.mxu0 %v80
    %464 = vmatmul.mubr.f32.gmra.mrb[0].mxu0 %v79
    %v465 = vpop.f32.mrb[0].mxu0
    %v466 = vadd.f32 %v381, %v465
    %v467 = vpop.f32.mrb[0].mxu0
    %468 = vmatprep.mubr.f32.mxu0 %v88
    %469 = vmatmul.mubr.f32.gmra.mrb[0].mxu0 %v87
    %v470 = vpop.f32.mrb[0].mxu0
    %v471 = vadd.f32 %v386, %v470
    %v472 = vpop.f32.mrb[0].mxu0
    %473 = vdwg.mxu0
    %474 = vmatprep.subr.mxu0 0.0
    %475 = vmatpush1.msra.mxu0 %v187
    %476 = vmatprep.subr.mxu0 0.0
    %477 = vmatpush1.msra.mxu0 %v188
    %478 = vmatprep.subr.mxu0 0.0
    %479 = vmatpush1.msra.mxu0 %v189
    %480 = vmatprep.subr.mxu0 0.0
    %481 = vmatpush1.msra.mxu0 %v190
    %482 = vmatprep.subr.mxu0 0.0
    %483 = vmatpush1.msra.mxu0 %v191
    %484 = vmatprep.subr.mxu0 0.0
    %485 = vmatpush1.msra.mxu0 %v192
    %486 = vmatprep.subr.mxu0 0.0
    %487 = vmatpush1.msra.mxu0 %v193
    %488 = vmatprep.subr.mxu0 0.0
    %489 = vmatpush1.msra.mxu0 %v194
    %490 = vmatprep.subr.mxu0 0.0
    %491 = vmatpush1.msra.mxu0 %v195
    %492 = vmatprep.subr.mxu0 0.0
    %493 = vmatpush1.msra.mxu0 %v196
    %494 = vmatprep.subr.mxu0 0.0
    %495 = vmatpush1.msra.mxu0 %v197
    %496 = vmatprep.subr.mxu0 0.0
    %497 = vmatpush1.msra.mxu0 %v198
    %498 = vmatprep.subr.mxu0 0.0
    %499 = vmatpush1.msra.mxu0 %v199
    %500 = vmatprep.subr.mxu0 0.0
    %501 = vmatpush1.msra.mxu0 %v200
    %502 = vmatprep.subr.mxu0 0.0
    %503 = vmatpush1.msra.mxu0 %v201
    %504 = vmatprep.subr.mxu0 0.0
    %505 = vmatpush1.msra.mxu0 %v202
    %506 = vmatprep.subr.mxu0 0.0
    %507 = vmatpush1.msra.mxu0 %v203
    %508 = vmatprep.subr.mxu0 0.0
    %509 = vmatpush1.msra.mxu0 %v204
    %510 = vmatprep.subr.mxu0 0.0
    %511 = vmatpush1.msra.mxu0 %v205
    %512 = vmatprep.subr.mxu0 0.0
    %513 = vmatpush1.msra.mxu0 %v206
    %514 = vmatprep.subr.mxu0 0.0
    %515 = vmatpush1.msra.mxu0 %v207
    %516 = vmatprep.subr.mxu0 0.0
    %517 = vmatpush1.msra.mxu0 %v208
    %518 = vmatprep.subr.mxu0 0.0
    %519 = vmatpush1.msra.mxu0 %v209
    %520 = vmatprep.subr.mxu0 0.0
    %521 = vmatpush1.msra.mxu0 %v210
    %522 = vmatprep.subr.mxu0 0.0
    %523 = vmatpush1.msra.mxu0 %v211
    %524 = vmatprep.subr.mxu0 0.0
    %525 = vmatpush1.msra.mxu0 %v212
    %526 = vmatprep.subr.mxu0 0.0
    %527 = vmatpush1.msra.mxu0 %v213
    %528 = vmatprep.subr.mxu0 0.0
    %529 = vmatpush1.msra.mxu0 %v214
    %530 = vmatprep.subr.mxu0 0.0
    %531 = vmatpush1.msra.mxu0 %v215
    %532 = vmatprep.subr.mxu0 0.0
    %533 = vmatpush1.msra.mxu0 %v216
    %534 = vmatprep.subr.mxu0 0.0
    %535 = vmatpush1.msra.mxu0 %v217
    %536 = vmatprep.subr.mxu0 0.0
    %537 = vmatpush1.msra.mxu0 %v218
    %538 = vmatprep.mubr.f32.mxu0 %v66
    %539 = vmatmul.mubr.f32.gmra.mrb[0].mxu0 %v65
    %v540 = vpop.f32.mrb[0].mxu0
    %v541 = vadd.f32 %v456, %v540
    %v542 = vpop.f32.mrb[0].mxu0
    %543 = vmatprep.mubr.f32.mxu0 %v74
    %544 = vmatmul.mubr.f32.gmra.mrb[0].mxu0 %v73
    %v545 = vpop.f32.mrb[0].mxu0
    %v546 = vadd.f32 %v461, %v545
    %v547 = vpop.f32.mrb[0].mxu0
    %548 = vmatprep.mubr.f32.mxu0 %v82
    %549 = vmatmul.mubr.f32.gmra.mrb[0].mxu0 %v81
    %v550 = vpop.f32.mrb[0].mxu0
    %v551 = vadd.f32 %v466, %v550
    %v552 = vpop.f32.mrb[0].mxu0
    %553 = vmatprep.mubr.f32.mxu0 %v90
    %554 = vmatmul.mubr.f32.gmra.mrb[0].mxu0 %v89
    %v555 = vpop.f32.mrb[0].mxu0
    %v556 = vadd.f32 %v471, %v555
    %v557 = vpop.f32.mrb[0].mxu0
    %558 = vdwg.mxu0
    %v559 = vld [vmem:[#allocation7] sm:$0xff]
    %v560 = vld [vmem:[#allocation7 + $0x8] sm:$0xff]
    %v561 = vld [vmem:[#allocation7 + $0x10] sm:$0xff]
    %v562 = vld [vmem:[#allocation7 + $0x18] sm:$0xff]
    %v563 = vld [vmem:[#allocation7 + $0x20] sm:$0xff]
    %v564 = vld [vmem:[#allocation7 + $0x28] sm:$0xff]
    %v565 = vld [vmem:[#allocation7 + $0x30] sm:$0xff]
    %v566 = vld [vmem:[#allocation7 + $0x38] sm:$0xff]
    %v567 = vld [vmem:[#allocation7 + $0x40] sm:$0xff]
    %v568 = vld [vmem:[#allocation7 + $0x48] sm:$0xff]
    %v569 = vld [vmem:[#allocation7 + $0x50] sm:$0xff]
    %v570 = vld [vmem:[#allocation7 + $0x58] sm:$0xff]
    %v571 = vld [vmem:[#allocation7 + $0x60] sm:$0xff]
    %v572 = vld [vmem:[#allocation7 + $0x68] sm:$0xff]
    %v573 = vld [vmem:[#allocation7 + $0x70] sm:$0xff]
    %v574 = vld [vmem:[#allocation7 + $0x78] sm:$0xff]
    %s575 = scalar_lea.vmem [#allocation7], 128
    %v576 = vld [vmem:[%s575] sm:$0xff]
    %v577 = vld [vmem:[%s575 + $0x8] sm:$0xff]
    %v578 = vld [vmem:[%s575 + $0x10] sm:$0xff]
    %v579 = vld [vmem:[%s575 + $0x18] sm:$0xff]
    %v580 = vld [vmem:[%s575 + $0x20] sm:$0xff]
    %v581 = vld [vmem:[%s575 + $0x28] sm:$0xff]
    %v582 = vld [vmem:[%s575 + $0x30] sm:$0xff]
    %v583 = vld [vmem:[%s575 + $0x38] sm:$0xff]
    %v584 = vld [vmem:[%s575 + $0x40] sm:$0xff]
    %v585 = vld [vmem:[%s575 + $0x48] sm:$0xff]
    %v586 = vld [vmem:[%s575 + $0x50] sm:$0xff]
    %v587 = vld [vmem:[%s575 + $0x58] sm:$0xff]
    %v588 = vld [vmem:[%s575 + $0x60] sm:$0xff]
    %v589 = vld [vmem:[%s575 + $0x68] sm:$0xff]
    %v590 = vld [vmem:[%s575 + $0x70] sm:$0xff]
    %v591 = vld [vmem:[%s575 + $0x78] sm:$0xff]
    %592 = vmatprep.subr.mxu0 0.0
    %593 = vmatpush1.msra.mxu0 %v576
    %594 = vmatprep.subr.mxu0 0.0
    %595 = vmatpush1.msra.mxu0 %v577
    %596 = vmatprep.subr.mxu0 0.0
    %597 = vmatpush1.msra.mxu0 %v578
    %598 = vmatprep.subr.mxu0 0.0
    %599 = vmatpush1.msra.mxu0 %v579
    %600 = vmatprep.subr.mxu0 0.0
    %601 = vmatpush1.msra.mxu0 %v580
    %602 = vmatprep.subr.mxu0 0.0
    %603 = vmatpush1.msra.mxu0 %v581
    %604 = vmatprep.subr.mxu0 0.0
    %605 = vmatpush1.msra.mxu0 %v582
    %606 = vmatprep.subr.mxu0 0.0
    %607 = vmatpush1.msra.mxu0 %v583
    %608 = vmatprep.subr.mxu0 0.0
    %609 = vmatpush1.msra.mxu0 %v584
    %610 = vmatprep.subr.mxu0 0.0
    %611 = vmatpush1.msra.mxu0 %v585
    %612 = vmatprep.subr.mxu0 0.0
    %613 = vmatpush1.msra.mxu0 %v586
    %614 = vmatprep.subr.mxu0 0.0
    %615 = vmatpush1.msra.mxu0 %v587
    %616 = vmatprep.subr.mxu0 0.0
    %617 = vmatpush1.msra.mxu0 %v588
    %618 = vmatprep.subr.mxu0 0.0
    %619 = vmatpush1.msra.mxu0 %v589
    %620 = vmatprep.subr.mxu0 0.0
    %621 = vmatpush1.msra.mxu0 %v590
    %622 = vmatprep.subr.mxu0 0.0
    %623 = vmatpush1.msra.mxu0 %v591
    %624 = vmatprep.subr.mxu0 0.0
    %625 = vmatpush1.msra.mxu0 0.0
    %626 = vmatprep.subr.mxu0 0.0
    %627 = vmatpush1.msra.mxu0 0.0
    %628 = vmatprep.subr.mxu0 0.0
    %629 = vmatpush1.msra.mxu0 0.0
    %630 = vmatprep.subr.mxu0 0.0
    %631 = vmatpush1.msra.mxu0 0.0
    %632 = vmatprep.subr.mxu0 0.0
    %633 = vmatpush1.msra.mxu0 0.0
    %634 = vmatprep.subr.mxu0 0.0
    %635 = vmatpush1.msra.mxu0 0.0
    %636 = vmatprep.subr.mxu0 0.0
    %637 = vmatpush1.msra.mxu0 0.0
    %638 = vmatprep.subr.mxu0 0.0
    %639 = vmatpush1.msra.mxu0 0.0
    %640 = vmatprep.subr.mxu0 0.0
    %641 = vmatpush1.msra.mxu0 0.0
    %642 = vmatprep.subr.mxu0 0.0
    %643 = vmatpush1.msra.mxu0 0.0
    %644 = vmatprep.subr.mxu0 0.0
    %645 = vmatpush1.msra.mxu0 0.0
    %646 = vmatprep.subr.mxu0 0.0
    %647 = vmatpush1.msra.mxu0 0.0
    %648 = vmatprep.subr.mxu0 0.0
    %649 = vmatpush1.msra.mxu0 0.0
    %650 = vmatprep.subr.mxu0 0.0
    %651 = vmatpush1.msra.mxu0 0.0
    %652 = vmatprep.subr.mxu0 0.0
    %653 = vmatpush1.msra.mxu0 0.0
    %654 = vmatprep.subr.mxu0 0.0
    %655 = vmatpush1.msra.mxu0 0.0
    %656 = vmatprep.mubr.f32.mxu0 0.0
    %657 = vmatmul.mubr.f32.gmra.mrb[0].mxu0 %v546
    %v658 = vpop.f32.mrb[0].mxu0
    %v659 = vadd.f32 0.0, %v658
    %v660 = vpop.f32.mrb[0].mxu0
    %661 = vdwg.mxu0
    %662 = vmatprep.subr.mxu0 0.0
    %663 = vmatpush1.msra.mxu0 %v559
    %664 = vmatprep.subr.mxu0 0.0
    %665 = vmatpush1.msra.mxu0 %v560
    %666 = vmatprep.subr.mxu0 0.0
    %667 = vmatpush1.msra.mxu0 %v561
    %668 = vmatprep.subr.mxu0 0.0
    %669 = vmatpush1.msra.mxu0 %v562
    %670 = vmatprep.subr.mxu0 0.0
    %671 = vmatpush1.msra.mxu0 %v563
    %672 = vmatprep.subr.mxu0 0.0
    %673 = vmatpush1.msra.mxu0 %v564
    %674 = vmatprep.subr.mxu0 0.0
    %675 = vmatpush1.msra.mxu0 %v565
    %676 = vmatprep.subr.mxu0 0.0
    %677 = vmatpush1.msra.mxu0 %v566
    %678 = vmatprep.subr.mxu0 0.0
    %679 = vmatpush1.msra.mxu0 %v567
    %680 = vmatprep.subr.mxu0 0.0
    %681 = vmatpush1.msra.mxu0 %v568
    %682 = vmatprep.subr.mxu0 0.0
    %683 = vmatpush1.msra.mxu0 %v569
    %684 = vmatprep.subr.mxu0 0.0
    %685 = vmatpush1.msra.mxu0 %v570
    %686 = vmatprep.subr.mxu0 0.0
    %687 = vmatpush1.msra.mxu0 %v571
    %688 = vmatprep.subr.mxu0 0.0
    %689 = vmatpush1.msra.mxu0 %v572
    %690 = vmatprep.subr.mxu0 0.0
    %691 = vmatpush1.msra.mxu0 %v573
    %692 = vmatprep.subr.mxu0 0.0
    %693 = vmatpush1.msra.mxu0 %v574
    %694 = vmatprep.subr.mxu0 0.0
    %695 = vmatpush1.msra.mxu0 0.0
    %696 = vmatprep.subr.mxu0 0.0
    %697 = vmatpush1.msra.mxu0 0.0
    %698 = vmatprep.subr.mxu0 0.0
    %699 = vmatpush1.msra.mxu0 0.0
    %700 = vmatprep.subr.mxu0 0.0
    %701 = vmatpush1.msra.mxu0 0.0
    %702 = vmatprep.subr.mxu0 0.0
    %703 = vmatpush1.msra.mxu0 0.0
    %704 = vmatprep.subr.mxu0 0.0
    %705 = vmatpush1.msra.mxu0 0.0
    %706 = vmatprep.subr.mxu0 0.0
    %707 = vmatpush1.msra.mxu0 0.0
    %708 = vmatprep.subr.mxu0 0.0
    %709 = vmatpush1.msra.mxu0 0.0
    %710 = vmatprep.subr.mxu0 0.0
    %711 = vmatpush1.msra.mxu0 0.0
    %712 = vmatprep.subr.mxu0 0.0
    %713 = vmatpush1.msra.mxu0 0.0
    %714 = vmatprep.subr.mxu0 0.0
    %715 = vmatpush1.msra.mxu0 0.0
    %716 = vmatprep.subr.mxu0 0.0
    %717 = vmatpush1.msra.mxu0 0.0
    %718 = vmatprep.subr.mxu0 0.0
    %719 = vmatpush1.msra.mxu0 0.0
    %720 = vmatprep.subr.mxu0 0.0
    %721 = vmatpush1.msra.mxu0 0.0
    %722 = vmatprep.subr.mxu0 0.0
    %723 = vmatpush1.msra.mxu0 0.0
    %724 = vmatprep.subr.mxu0 0.0
    %725 = vmatpush1.msra.mxu0 0.0
    %726 = vmatprep.mubr.f32.mxu0 0.0
    %727 = vmatmul.mubr.f32.gmra.mrb[0].mxu0 %v541
    %v728 = vpop.f32.mrb[0].mxu0
    %v729 = vadd.f32 %v659, %v728
    %v730 = vpop.f32.mrb[0].mxu0
    %731 = vdwg.mxu0
    %s732 = scalar_lea.vmem [#allocation7], 256
    %v733 = vld [vmem:[%s732] sm:$0xff]
    %v734 = vld [vmem:[%s732 + $0x8] sm:$0xff]
    %v735 = vld [vmem:[%s732 + $0x10] sm:$0xff]
    %v736 = vld [vmem:[%s732 + $0x18] sm:$0xff]
    %v737 = vld [vmem:[%s732 + $0x20] sm:$0xff]
    %v738 = vld [vmem:[%s732 + $0x28] sm:$0xff]
    %v739 = vld [vmem:[%s732 + $0x30] sm:$0xff]
    %v740 = vld [vmem:[%s732 + $0x38] sm:$0xff]
    %v741 = vld [vmem:[%s732 + $0x40] sm:$0xff]
    %v742 = vld [vmem:[%s732 + $0x48] sm:$0xff]
    %v743 = vld [vmem:[%s732 + $0x50] sm:$0xff]
    %v744 = vld [vmem:[%s732 + $0x58] sm:$0xff]
    %v745 = vld [vmem:[%s732 + $0x60] sm:$0xff]
    %v746 = vld [vmem:[%s732 + $0x68] sm:$0xff]
    %v747 = vld [vmem:[%s732 + $0x70] sm:$0xff]
    %v748 = vld [vmem:[%s732 + $0x78] sm:$0xff]
    %749 = vmatprep.subr.mxu0 0.0
    %750 = vmatpush1.msra.mxu0 %v733
    %751 = vmatprep.subr.mxu0 0.0
    %752 = vmatpush1.msra.mxu0 %v734
    %753 = vmatprep.subr.mxu0 0.0
    %754 = vmatpush1.msra.mxu0 %v735
    %755 = vmatprep.subr.mxu0 0.0
    %756 = vmatpush1.msra.mxu0 %v736
    %757 = vmatprep.subr.mxu0 0.0
    %758 = vmatpush1.msra.mxu0 %v737
    %759 = vmatprep.subr.mxu0 0.0
    %760 = vmatpush1.msra.mxu0 %v738
    %761 = vmatprep.subr.mxu0 0.0
    %762 = vmatpush1.msra.mxu0 %v739
    %763 = vmatprep.subr.mxu0 0.0
    %764 = vmatpush1.msra.mxu0 %v740
    %765 = vmatprep.subr.mxu0 0.0
    %766 = vmatpush1.msra.mxu0 %v741
    %767 = vmatprep.subr.mxu0 0.0
    %768 = vmatpush1.msra.mxu0 %v742
    %769 = vmatprep.subr.mxu0 0.0
    %770 = vmatpush1.msra.mxu0 %v743
    %771 = vmatprep.subr.mxu0 0.0
    %772 = vmatpush1.msra.mxu0 %v744
    %773 = vmatprep.subr.mxu0 0.0
    %774 = vmatpush1.msra.mxu0 %v745
    %775 = vmatprep.subr.mxu0 0.0
    %776 = vmatpush1.msra.mxu0 %v746
    %777 = vmatprep.subr.mxu0 0.0
    %778 = vmatpush1.msra.mxu0 %v747
    %779 = vmatprep.subr.mxu0 0.0
    %780 = vmatpush1.msra.mxu0 %v748
    %781 = vmatprep.subr.mxu0 0.0
    %782 = vmatpush1.msra.mxu0 0.0
    %783 = vmatprep.subr.mxu0 0.0
    %784 = vmatpush1.msra.mxu0 0.0
    %785 = vmatprep.subr.mxu0 0.0
    %786 = vmatpush1.msra.mxu0 0.0
    %787 = vmatprep.subr.mxu0 0.0
    %788 = vmatpush1.msra.mxu0 0.0
    %789 = vmatprep.subr.mxu0 0.0
    %790 = vmatpush1.msra.mxu0 0.0
    %791 = vmatprep.subr.mxu0 0.0
    %792 = vmatpush1.msra.mxu0 0.0
    %793 = vmatprep.subr.mxu0 0.0
    %794 = vmatpush1.msra.mxu0 0.0
    %795 = vmatprep.subr.mxu0 0.0
    %796 = vmatpush1.msra.mxu0 0.0
    %797 = vmatprep.subr.mxu0 0.0
    %798 = vmatpush1.msra.mxu0 0.0
    %799 = vmatprep.subr.mxu0 0.0
    %800 = vmatpush1.msra.mxu0 0.0
    %801 = vmatprep.subr.mxu0 0.0
    %802 = vmatpush1.msra.mxu0 0.0
    %803 = vmatprep.subr.mxu0 0.0
    %804 = vmatpush1.msra.mxu0 0.0
    %805 = vmatprep.subr.mxu0 0.0
    %806 = vmatpush1.msra.mxu0 0.0
    %807 = vmatprep.subr.mxu0 0.0
    %808 = vmatpush1.msra.mxu0 0.0
    %809 = vmatprep.subr.mxu0 0.0
    %810 = vmatpush1.msra.mxu0 0.0
    %811 = vmatprep.subr.mxu0 0.0
    %812 = vmatpush1.msra.mxu0 0.0
    %813 = vmatprep.mubr.f32.mxu0 0.0
    %814 = vmatmul.mubr.f32.gmra.mrb[0].mxu0 %v551
    %v815 = vpop.f32.mrb[0].mxu0
    %v816 = vadd.f32 0.0, %v815
    %v817 = vpop.f32.mrb[0].mxu0
    %818 = vdwg.mxu0
    %v819 = vadd.f32 %v729, %v816
    %s820 = scalar_lea.vmem [#allocation7], 384
    %v821 = vld [vmem:[%s820] sm:$0xff]
    %v822 = vld [vmem:[%s820 + $0x8] sm:$0xff]
    %v823 = vld [vmem:[%s820 + $0x10] sm:$0xff]
    %v824 = vld [vmem:[%s820 + $0x18] sm:$0xff]
    %v825 = vld [vmem:[%s820 + $0x20] sm:$0xff]
    %v826 = vld [vmem:[%s820 + $0x28] sm:$0xff]
    %v827 = vld [vmem:[%s820 + $0x30] sm:$0xff]
    %v828 = vld [vmem:[%s820 + $0x38] sm:$0xff]
    %v829 = vld [vmem:[%s820 + $0x40] sm:$0xff]
    %v830 = vld [vmem:[%s820 + $0x48] sm:$0xff]
    %v831 = vld [vmem:[%s820 + $0x50] sm:$0xff]
    %v832 = vld [vmem:[%s820 + $0x58] sm:$0xff]
    %v833 = vld [vmem:[%s820 + $0x60] sm:$0xff]
    %v834 = vld [vmem:[%s820 + $0x68] sm:$0xff]
    %v835 = vld [vmem:[%s820 + $0x70] sm:$0xff]
    %v836 = vld [vmem:[%s820 + $0x78] sm:$0xff]
    %837 = vmatprep.subr.mxu0 0.0
    %838 = vmatpush1.msra.mxu0 %v821
    %839 = vmatprep.subr.mxu0 0.0
    %840 = vmatpush1.msra.mxu0 %v822
    %841 = vmatprep.subr.mxu0 0.0
    %842 = vmatpush1.msra.mxu0 %v823
    %843 = vmatprep.subr.mxu0 0.0
    %844 = vmatpush1.msra.mxu0 %v824
    %845 = vmatprep.subr.mxu0 0.0
    %846 = vmatpush1.msra.mxu0 %v825
    %847 = vmatprep.subr.mxu0 0.0
    %848 = vmatpush1.msra.mxu0 %v826
    %849 = vmatprep.subr.mxu0 0.0
    %850 = vmatpush1.msra.mxu0 %v827
    %851 = vmatprep.subr.mxu0 0.0
    %852 = vmatpush1.msra.mxu0 %v828
    %853 = vmatprep.subr.mxu0 0.0
    %854 = vmatpush1.msra.mxu0 %v829
    %855 = vmatprep.subr.mxu0 0.0
    %856 = vmatpush1.msra.mxu0 %v830
    %857 = vmatprep.subr.mxu0 0.0
    %858 = vmatpush1.msra.mxu0 %v831
    %859 = vmatprep.subr.mxu0 0.0
    %860 = vmatpush1.msra.mxu0 %v832
    %861 = vmatprep.subr.mxu0 0.0
    %862 = vmatpush1.msra.mxu0 %v833
    %863 = vmatprep.subr.mxu0 0.0
    %864 = vmatpush1.msra.mxu0 %v834
    %865 = vmatprep.subr.mxu0 0.0
    %866 = vmatpush1.msra.mxu0 %v835
    %867 = vmatprep.subr.mxu0 0.0
    %868 = vmatpush1.msra.mxu0 %v836
    %869 = vmatprep.subr.mxu0 0.0
    %870 = vmatpush1.msra.mxu0 0.0
    %871 = vmatprep.subr.mxu0 0.0
    %872 = vmatpush1.msra.mxu0 0.0
    %873 = vmatprep.subr.mxu0 0.0
    %874 = vmatpush1.msra.mxu0 0.0
    %875 = vmatprep.subr.mxu0 0.0
    %876 = vmatpush1.msra.mxu0 0.0
    %877 = vmatprep.subr.mxu0 0.0
    %878 = vmatpush1.msra.mxu0 0.0
    %879 = vmatprep.subr.mxu0 0.0
    %880 = vmatpush1.msra.mxu0 0.0
    %881 = vmatprep.subr.mxu0 0.0
    %882 = vmatpush1.msra.mxu0 0.0
    %883 = vmatprep.subr.mxu0 0.0
    %884 = vmatpush1.msra.mxu0 0.0
    %885 = vmatprep.subr.mxu0 0.0
    %886 = vmatpush1.msra.mxu0 0.0
    %887 = vmatprep.subr.mxu0 0.0
    %888 = vmatpush1.msra.mxu0 0.0
    %889 = vmatprep.subr.mxu0 0.0
    %890 = vmatpush1.msra.mxu0 0.0
    %891 = vmatprep.subr.mxu0 0.0
    %892 = vmatpush1.msra.mxu0 0.0
    %893 = vmatprep.subr.mxu0 0.0
    %894 = vmatpush1.msra.mxu0 0.0
    %895 = vmatprep.subr.mxu0 0.0
    %896 = vmatpush1.msra.mxu0 0.0
    %897 = vmatprep.subr.mxu0 0.0
    %898 = vmatpush1.msra.mxu0 0.0
    %899 = vmatprep.subr.mxu0 0.0
    %900 = vmatpush1.msra.mxu0 0.0
    %901 = vmatprep.mubr.f32.mxu0 0.0
    %902 = vmatmul.mubr.f32.gmra.mrb[0].mxu0 %v556
    %v903 = vpop.f32.mrb[0].mxu0
    %v904 = vadd.f32 0.0, %v903
    %v905 = vpop.f32.mrb[0].mxu0
    %906 = vdwg.mxu0
    %v907 = vadd.f32 %v819, %v904
    %v908 = vld [vmem:[%s3] sm:$0x1]
    %v910 = vlaneseq
    %v911 = vshrl.u32 %v910, 7
    %v912 = vsub.s32 0, %v911
    %v913 = vrot.slane %v908, %v912
    %v915 = vadd.f32 %v907, %v913
    %v916 = vmul.f32 %v915, 0.5
    %v917 = vtanh.pop %v916
    %918 = vst [vmem:[#allocation8] sm:$0xff] %v917
    // Predicated region
    $region30: #{tpu_custom_call.1} parent=1 // pred_check
      _
    $region31: #{tpu_custom_call.1} parent=1 // pred_check_branch
      %920 = sbr.rel (0) target = $region33
    $region32: #{tpu_custom_call.1} parent=1 // pred_region
      %s922 = ssub.s32 128, 128
      %923 = vsyncadd [#allocation4], %s922
      %s925 = sshll.u32 [#allocation8], 4
      %s926 = int_to_ptr.vmem [resolvable:$true] %s925
      %928 = dma.vmem_to_hbm [thread:$0]  %s926, 128, %s4, [#allocation4]
    $region33: #{tpu_custom_call.1} parent=1 // pred_fallthru
      _
    // Predicated region
    $region34: #{tpu_custom_call.1} parent=1 // pred_check
      _
    $region35: #{tpu_custom_call.1} parent=1 // pred_check_branch
      %930 = sbr.rel (0) target = $region37
    $region36: #{tpu_custom_call.1} parent=1 // pred_region
      %931 = dma.done [#allocation4], 128
    $region37: #{tpu_custom_call.1} parent=1 // pred_fallthru
      _
    %932 = vsyncpa [#allocation3], 1
    %933 = vsyncpa [#allocation6], 1
    %934 = vsyncpa [#allocation4], 1

</llo_original>
